<compile_context>
chip_gen: v6e
topology: v6e:2x2x1
jax: 0.10.0
libtpu: 0.0.40
codegen_flags: <defaults>
</compile_context>

<pallas_src>
import jax
import jax.numpy as jnp
from jax.experimental import pallas as pl
from jax.experimental.pallas import tpu as pltpu


def _round_up(x: int, m: int) -> int:
    return (x + m - 1) // m * m


def _mlp_kernel(x_ref, w1_ref, b1_ref, w2_ref, b2_ref, o_ref):
    # x_ref:  [TB, K]        bf16   (tiled over the batch grid)
    # w1_ref: [K, Hp]        bf16   (VMEM-resident across the grid)
    # b1_ref: [1, Hp]        f32
    # w2_ref: [Hp, token]    bf16   (VMEM-resident across the grid)
    # b2_ref: [1, token]     f32
    # o_ref:  [TB, token]           (true, unpadded token width)
    h = jnp.dot(x_ref[...], w1_ref[...], preferred_element_type=jnp.float32)
    h = jnp.maximum(h + b1_ref[...], 0.0)
    o = jnp.dot(h.astype(w2_ref.dtype), w2_ref[...],
                preferred_element_type=jnp.float32)
    o_ref[...] = (o + b2_ref[...]).astype(o_ref.dtype)


def prepare_vector_input_adaptor_params(w1, b1, w2, b2):
    """One-time (init-time) padding / casting of the MLP parameters.

    Pads hidden 64 -> 128 (lane-dense intermediate); padded b1 columns are 0 so
    ReLU keeps them 0 and padded w2 rows are 0, so the math is unchanged.
    """
    in_size, hidden = w1.shape
    token = w2.shape[1]
    hidden_p = _round_up(hidden, 128)
    w1_p = jnp.pad(w1, ((0, 0), (0, hidden_p - hidden))).astype(jnp.bfloat16)
    b1_p = jnp.pad(jnp.reshape(b1, (1, hidden)),
                   ((0, 0), (0, hidden_p - hidden))).astype(jnp.float32)
    w2_p = jnp.pad(w2, ((0, hidden_p - hidden), (0, 0))).astype(jnp.bfloat16)
    b2_p = jnp.reshape(b2, (1, token)).astype(jnp.float32)
    return w1_p, b1_p, w2_p, b2_p


def vector_input_adaptor(x, params, *, block_b: int = 512,
                         out_dtype=jnp.float32):
    """x: [B, input_size] -> [B, 1, token_size], matching the PyTorch module.

    `params` comes from prepare_vector_input_adaptor_params (padded once).
    out_dtype defaults to f32 (PyTorch Linear returns the parameter dtype);
    pass jnp.bfloat16 to halve writeback if downstream consumers accept it.
    """
    w1_p, b1_p, w2_p, b2_p = params
    B, in_size = x.shape
    hidden_p = w1_p.shape[1]
    token = w2_p.shape[1]

    # Batch tiling: >=2 grid steps when there is enough work (so the "parallel"
    # axis actually shards across v7x's two TensorCores); tile derived from the
    # grid so padding waste is <=15 rows per tile instead of up to block_b - 1.
    grid_b = max(pl.cdiv(B, block_b), 2 if B > 16 else 1)
    tb = _round_up(pl.cdiv(B, grid_b), 16)
    b_pad = grid_b * tb

    x_p = x if b_pad == B else jnp.pad(x, ((0, b_pad - B), (0, 0)))
    x_p = x_p.astype(jnp.bfloat16)

    out_bytes = jnp.dtype(out_dtype).itemsize
    cost = pl.CostEstimate(
        flops=2 * b_pad * (in_size * hidden_p + hidden_p * token),
        transcendentals=0,
        bytes_accessed=(b_pad * in_size * 2
                        + (w1_p.size + w2_p.size) * 2
                        + (b1_p.size + b2_p.size) * 4
                        + b_pad * token * out_bytes),
    )

    # Rough per-step VMEM use (double-buffered x/out tiles + resident weights
    # + f32 intermediates); only raise the scoped limit when actually needed.
    vmem_est = (2 * tb * (in_size * 2 + token * out_bytes)
                + tb * (hidden_p + token) * 4
                + (w1_p.size + w2_p.size) * 2 + (b1_p.size + b2_p.size) * 4)
    vmem_limit = 64 * 1024 * 1024 if vmem_est > 12 * 1024 * 1024 else None

    out = pl.pallas_call(
        _mlp_kernel,
        out_shape=jax.ShapeDtypeStruct((b_pad, token), out_dtype),
        grid_spec=pl.GridSpec(
            grid=(grid_b,),
            in_specs=[
                pl.BlockSpec((tb, in_size), lambda i: (i, 0)),        # x: tiled over B
                pl.BlockSpec((in_size, hidden_p), lambda i: (0, 0)),  # w1: resident
                pl.BlockSpec((1, hidden_p), lambda i: (0, 0)),        # b1: resident
                pl.BlockSpec((hidden_p, token), lambda i: (0, 0)),    # w2: resident
                pl.BlockSpec((1, token), lambda i: (0, 0)),           # b2: resident
            ],
            out_specs=pl.BlockSpec((tb, token), lambda i: (i, 0)),
        ),
        compiler_params=pltpu.CompilerParams(
            dimension_semantics=("parallel",),
            vmem_limit_bytes=vmem_limit),
        cost_estimate=cost,
    )(x_p, w1_p, b1_p, w2_p, b2_p)

    out = out if b_pad == B else out[:B]
    # unsqueeze(1): [B, token] -> [B, 1, token]
    return out.reshape(B, 1, token)


if __name__ == "__main__":
    # Module hyperparameters (small, consistent with module defaults).
    B = 4
    input_size = 16
    hidden_size = 64
    token_size = 258   # module default

    key = jax.random.PRNGKey(0)
    kx, k1, k2, k3, k4 = jax.random.split(key, 5)

    # Deterministic synthetic parameters (not a checkpoint load).
    x = jax.random.normal(kx, (B, input_size), dtype=jnp.float32)
    w1 = jax.random.normal(k1, (input_size, hidden_size), dtype=jnp.float32) * 0.1
    b1 = jax.random.normal(k2, (1, hidden_size), dtype=jnp.float32) * 0.1
    w2 = jax.random.normal(k3, (hidden_size, token_size), dtype=jnp.float32) * 0.1
    b2 = jax.random.normal(k4, (1, token_size), dtype=jnp.float32) * 0.1

    params = prepare_vector_input_adaptor_params(w1, b1, w2, b2)
    out = vector_input_adaptor(x, params)
    out = jax.block_until_ready(out)
    assert out.shape == (B, 1, token_size), out.shape
    assert out.dtype == jnp.float32, out.dtype

    # Pure-JAX f32 reference of the forward semantics (kernel uses bf16 MXU
    # operands with f32 accumulation, so the tolerance is loosened).
    ref_f32 = (jnp.maximum(x @ w1 + b1, 0.0) @ w2 + b2)[:, None, :]
    assert jnp.allclose(out, ref_f32, atol=2e-2, rtol=2e-2)

    # Tighter check against a bf16-operand / f32-accumulate reference.
    h_ref = jnp.maximum(
        jnp.dot(x.astype(jnp.bfloat16), w1.astype(jnp.bfloat16),
                preferred_element_type=jnp.float32) + b1, 0.0)
    ref_bf16 = (jnp.dot(h_ref.astype(jnp.bfloat16), w2.astype(jnp.bfloat16),
                        preferred_element_type=jnp.float32) + b2)[:, None, :]
    assert jnp.allclose(out, ref_bf16, atol=1e-3, rtol=1e-3)

    print("KERNEL_OK")
</pallas_src>

<mosaic_0001>
module attributes {stable_mosaic.version = 11 : i64} {
  func.func @_mlp_kernel(%arg0: i32, %arg1: memref<16x16xbf16, #tpu.memory_space<vmem>>, %arg2: memref<16x128xbf16, #tpu.memory_space<vmem>>, %arg3: memref<1x128xf32, #tpu.memory_space<vmem>>, %arg4: memref<128x258xbf16, #tpu.memory_space<vmem>>, %arg5: memref<1x258xf32, #tpu.memory_space<vmem>>, %arg6: memref<16x258xf32, #tpu.memory_space<vmem>>) attributes {dimension_semantics = [#tpu.dimension_semantics<parallel>], iteration_bounds = array<i64: 1>, scalar_prefetch = 0 : i64, scratch_operands = 0 : i64, tpu.core_type = #tpu.core_type<tc>, window_params = [{transform_indices = @transform_0, window_bounds = array<i64: 16, 16>}, {pipeline_mode = #tpu.pipeline_mode<synchronous>, transform_indices = @transform_1, window_bounds = array<i64: 16, 128>}, {pipeline_mode = #tpu.pipeline_mode<synchronous>, transform_indices = @transform_2, window_bounds = array<i64: 1, 128>}, {pipeline_mode = #tpu.pipeline_mode<synchronous>, transform_indices = @transform_3, window_bounds = array<i64: 128, 258>}, {pipeline_mode = #tpu.pipeline_mode<synchronous>, transform_indices = @transform_4, window_bounds = array<i64: 1, 258>}, {transform_indices = @transform_5, window_bounds = array<i64: 16, 258>}]} {
    %c0 = arith.constant 0 : index
    %c0_0 = arith.constant 0 : index
    %0 = vector.load %arg1[%c0, %c0_0] : memref<16x16xbf16, #tpu.memory_space<vmem>>, vector<16x16xbf16>
    %c0_1 = arith.constant 0 : index
    %c0_2 = arith.constant 0 : index
    %1 = vector.load %arg2[%c0_1, %c0_2] : memref<16x128xbf16, #tpu.memory_space<vmem>>, vector<16x128xbf16>
    %cst = arith.constant dense<0.000000e+00> : vector<16x128xf32>
    %2 = tpu.matmul %0, %1, %cst {dimension_numbers = #tpu.dot_dimension_numbers<[1], [0], [0], [1], [0, 0, 1, 1], [], []>} : vector<16x16xbf16>, vector<16x128xbf16>, vector<16x128xf32> -> vector<16x128xf32>
    %c0_3 = arith.constant 0 : index
    %c0_4 = arith.constant 0 : index
    %3 = vector.load %arg3[%c0_3, %c0_4] : memref<1x128xf32, #tpu.memory_space<vmem>>, vector<1x128xf32>
    %4 = vector.broadcast %3 : vector<1x128xf32> to vector<16x128xf32>
    %5 = arith.addf %2, %4 : vector<16x128xf32>
    %cst_5 = arith.constant 0.000000e+00 : f32
    %6 = vector.broadcast %cst_5 : f32 to vector<16x128xf32>
    %7 = arith.maximumf %5, %6 : vector<16x128xf32>
    %8 = arith.truncf %7 : vector<16x128xf32> to vector<16x128xbf16>
    %c0_6 = arith.constant 0 : index
    %c0_7 = arith.constant 0 : index
    %9 = vector.load %arg4[%c0_6, %c0_7] : memref<128x258xbf16, #tpu.memory_space<vmem>>, vector<128x258xbf16>
    %cst_8 = arith.constant dense<0.000000e+00> : vector<16x258xf32>
    %10 = tpu.matmul %8, %9, %cst_8 {dimension_numbers = #tpu.dot_dimension_numbers<[1], [0], [0], [1], [0, 0, 1, 1], [], []>} : vector<16x128xbf16>, vector<128x258xbf16>, vector<16x258xf32> -> vector<16x258xf32>
    %c0_9 = arith.constant 0 : index
    %c0_10 = arith.constant 0 : index
    %11 = vector.load %arg5[%c0_9, %c0_10] : memref<1x258xf32, #tpu.memory_space<vmem>>, vector<1x258xf32>
    %12 = vector.broadcast %11 : vector<1x258xf32> to vector<16x258xf32>
    %13 = arith.addf %10, %12 : vector<16x258xf32>
    %c0_11 = arith.constant 0 : index
    %c0_12 = arith.constant 0 : index
    %14 = vector.load %arg6[%c0_11, %c0_12] : memref<16x258xf32, #tpu.memory_space<vmem>>, vector<16x258xf32>
    tpu.vector_store %arg6[%c0_11, %c0_12], %13 {strides = array<i32>} : memref<16x258xf32, #tpu.memory_space<vmem>>, vector<16x258xf32>,
    return
  }
  func.func @transform_0(%arg0: i32) -> (i32, i32) {
    %c0_i32 = arith.constant 0 : i32
    %c0_i32_0 = arith.constant 0 : i32
    return %arg0, %c0_i32 : i32, i32
  }
  func.func @transform_1(%arg0: i32) -> (i32, i32) {
    %c0_i32 = arith.constant 0 : i32
    %c0_i32_0 = arith.constant 0 : i32
    %c0_i32_1 = arith.constant 0 : i32
    return %c0_i32, %c0_i32_0 : i32, i32
  }
  func.func @transform_2(%arg0: i32) -> (i32, i32) {
    %c0_i32 = arith.constant 0 : i32
    %c0_i32_0 = arith.constant 0 : i32
    %c0_i32_1 = arith.constant 0 : i32
    return %c0_i32, %c0_i32_0 : i32, i32
  }
  func.func @transform_3(%arg0: i32) -> (i32, i32) {
    %c0_i32 = arith.constant 0 : i32
    %c0_i32_0 = arith.constant 0 : i32
    %c0_i32_1 = arith.constant 0 : i32
    return %c0_i32, %c0_i32_0 : i32, i32
  }
  func.func @transform_4(%arg0: i32) -> (i32, i32) {
    %c0_i32 = arith.constant 0 : i32
    %c0_i32_0 = arith.constant 0 : i32
    %c0_i32_1 = arith.constant 0 : i32
    return %c0_i32, %c0_i32_0 : i32, i32
  }
  func.func @transform_5(%arg0: i32) -> (i32, i32) {
    %c0_i32 = arith.constant 0 : i32
    %c0_i32_0 = arith.constant 0 : i32
    return %arg0, %c0_i32 : i32, i32
  }
}

</mosaic_0001>

<llo_original>
// kernel: tpu_custom_call.1
$region0: #{tpu_custom_call.1}
  #allocation0 [shape = 'u32[]', space=smem, size = 0x4, offset = 0x4, fixed_abs, tag = 'smem constant byte address 0x4 - core index']
  #allocation1 [shape = 'u32[144,128]{1,0:T(1,128)}', space=vmem, size = 0x12000, scoped, tag = 'internal scratch']
  %s0 = inlined_call_operand.vmem [shape: bf16[16,16], index: 0, kind: input, shape index: {}]
  %s1 = inlined_call_operand.vmem [shape: bf16[16,128], index: 1, kind: input, shape index: {}]
  %s2 = inlined_call_operand.vmem [shape: f32[1,128], index: 2, kind: input, shape index: {}]
  %s3 = inlined_call_operand.vmem [shape: bf16[128,258], index: 3, kind: input, shape index: {}]
  %s4 = inlined_call_operand.vmem [shape: f32[1,258], index: 4, kind: input, shape index: {}]
  %s5 = inlined_call_operand.hbm [shape: f32[16,258], index: 5, kind: output, shape index: {}]
  %s6 = sld [smem:[#allocation0]]
  $region30: #{tpu_custom_call.1} parent=0
    _
  %s8 = ssub.s32 1, %s6
  %s9 = scalar_select 0, %s8, %s6
  $region1: #{tpu_custom_call.1} parent=0
    #allocation2 [shape = 'u8[24576]{0}', space=vmem, size = 0x6000, scoped, tag = 'output window, operand 0, single buffered']
    #allocation3 [shape = 's32[1]{0}', space=sflag, size = 0x4, scoped, tag = 'scoped memory for tpu_custom_call.1']
    %10 = vsyncpa [#allocation3], 0
    // Predicated region
    $region2: #{tpu_custom_call.1} parent=1 // pred_check
      _
    $region3: #{tpu_custom_call.1} parent=1 // pred_check_branch
      %12 = sbr.rel (0) target = $region5
    $region4: #{tpu_custom_call.1} parent=1 // pred_region
      _
    $region5: #{tpu_custom_call.1} parent=1 // pred_fallthru
      _
    // Predicated region
    $region6: #{tpu_custom_call.1} parent=1 // pred_check
      _
    $region7: #{tpu_custom_call.1} parent=1 // pred_check_branch
      %14 = sbr.rel (0) target = $region9
    $region8: #{tpu_custom_call.1} parent=1 // pred_region
      _
    $region9: #{tpu_custom_call.1} parent=1 // pred_fallthru
      _
    // Predicated region
    $region10: #{tpu_custom_call.1} parent=1 // pred_check
      _
    $region11: #{tpu_custom_call.1} parent=1 // pred_check_branch
      %16 = sbr.rel (0) target = $region13
    $region12: #{tpu_custom_call.1} parent=1 // pred_region
      _
    $region13: #{tpu_custom_call.1} parent=1 // pred_fallthru
      _
    // Predicated region
    $region14: #{tpu_custom_call.1} parent=1 // pred_check
      _
    $region15: #{tpu_custom_call.1} parent=1 // pred_check_branch
      %18 = sbr.rel (0) target = $region17
    $region16: #{tpu_custom_call.1} parent=1 // pred_region
      _
    $region17: #{tpu_custom_call.1} parent=1 // pred_fallthru
      _
    // Predicated region
    $region18: #{tpu_custom_call.1} parent=1 // pred_check
      _
    $region19: #{tpu_custom_call.1} parent=1 // pred_check_branch
      %20 = sbr.rel (0) target = $region21
    $region20: #{tpu_custom_call.1} parent=1 // pred_region
      _
    $region21: #{tpu_custom_call.1} parent=1 // pred_fallthru
      _
    %v22 = vld [vmem:[%s0] sm:$0xf]
    %v23 = vld [vmem:[%s0 + $0x4] sm:$0xf]
    %v24 = vld [vmem:[%s1] sm:$0xf]
    %v25 = vld [vmem:[%s1 + $0x4] sm:$0xf]
    %v26 = vld [vmem:[%s2] sm:$0x1]
    %v28 = vlaneseq
    %v29 = vshrl.u32 %v28, 7
    %v30 = vsub.s32 0, %v29
    %v31 = vrot.slane %v26, %v30
    %v35 = vunpack.c.l.b16 %v22
    %v36 = vunpack.c.l.b16 %v23
    %v37 = vpack.c.b16 %v36, %v35
    %v40 = vunpack.c.l.b16 %v24
    %v41 = vunpack.c.l.b16 %v25
    %v42 = vpack.c.b16 %v41, %v40
    %vm44 = vcmask 130048
    %v46 = vsel %vm44, %v37, 0
    %48 = vmatprep.subr.bf16.mxu0 0
    %49 = vmatpush1.bf16.msra.mxu0 0
    %50 = vmatprep.subr.bf16.mxu0 0
    %51 = vmatpush1.bf16.msra.mxu0 0
    %52 = vmatprep.subr.bf16.mxu0 0
    %53 = vmatpush1.bf16.msra.mxu0 0
    %54 = vmatprep.subr.bf16.mxu0 0
    %55 = vmatpush1.bf16.msra.mxu0 0
    %56 = vmatprep.subr.bf16.mxu0 0
    %57 = vmatpush1.bf16.msra.mxu0 0
    %58 = vmatprep.subr.bf16.mxu0 0
    %59 = vmatpush1.bf16.msra.mxu0 0
    %60 = vmatprep.subr.bf16.mxu0 0
    %61 = vmatpush1.bf16.msra.mxu0 0
    %62 = vmatprep.subr.bf16.mxu0 0
    %63 = vmatpush1.bf16.msra.mxu0 %v42
    %64 = vmatprep.subr.bf16.mxu0 0
    %65 = vmatpush2.bf16.msra.mxu0 0
    %66 = vmatprep.subr.bf16.mxu0 0
    %67 = vmatpush2.bf16.msra.mxu0 0
    %68 = vmatprep.subr.bf16.mxu0 0
    %69 = vmatpush2.bf16.msra.mxu0 0
    %70 = vmatprep.subr.bf16.mxu0 0
    %71 = vmatpush2.bf16.msra.mxu0 0
    %72 = vmatprep.subr.bf16.mxu0 0
    %73 = vmatpush2.bf16.msra.mxu0 0
    %74 = vmatprep.subr.bf16.mxu0 0
    %75 = vmatpush2.bf16.msra.mxu0 0
    %76 = vmatprep.subr.bf16.mxu0 0
    %77 = vmatpush2.bf16.msra.mxu0 0
    %78 = vmatprep.subr.bf16.mxu0 0
    %79 = vmatpush2.bf16.msra.mxu0 0
    %80 = vmatprep.mubr.bf16.mxu0 0
    %81 = vmatmul.mubr.bf16.gmra.mxu0 %v46
    %v82 = vpop.f32.mrf.mxu0
    %v83 = vadd.f32 %v31, %v82
    %v84 = vpop.f32.mrf.mxu0
    %v85 = vpop.f32.mrf.mxu0
    %v86 = vadd.f32 %v31, %v85
    %v87 = vpop.f32.mrf.mxu0
    %88 = vdwg.mxu0
    %v89 = vmax.f32 %v83, 0.0
    %v90 = vmax.f32 %v86, 0.0
    %v91 = vpack.c.bf16 %v90, %v89
    %v92 = vld [vmem:[%s3] sm:$0xff]
    %v93 = vld [vmem:[%s3 + $0x8] sm:$0xf]
    %v94 = vld [vmem:[%s3 + $0xc] sm:$0xff]
    %v95 = vld [vmem:[%s3 + $0x14] sm:$0xf]
    %v96 = vld [vmem:[%s3 + $0x18] sm:$0xff]
    %v97 = vld [vmem:[%s3 + $0x20] sm:$0xf]
    %v98 = vld [vmem:[%s3 + $0x24] sm:$0xff]
    %v99 = vld [vmem:[%s3 + $0x2c] sm:$0xf]
    %v100 = vld [vmem:[%s3 + $0x30] sm:$0xff]
    %v101 = vld [vmem:[%s3 + $0x38] sm:$0xf]
    %v102 = vld [vmem:[%s3 + $0x3c] sm:$0xff]
    %v103 = vld [vmem:[%s3 + $0x44] sm:$0xf]
    %v104 = vld [vmem:[%s3 + $0x48] sm:$0xff]
    %v105 = vld [vmem:[%s3 + $0x50] sm:$0xf]
    %v106 = vld [vmem:[%s3 + $0x54] sm:$0xff]
    %v107 = vld [vmem:[%s3 + $0x5c] sm:$0xf]
    %v108 = vld [vmem:[%s3 + $0x60] sm:$0xff]
    %v109 = vld [vmem:[%s3 + $0x68] sm:$0xf]
    %v110 = vld [vmem:[%s3 + $0x6c] sm:$0xff]
    %v111 = vld [vmem:[%s3 + $0x74] sm:$0xf]
    %v112 = vld [vmem:[%s3 + $0x78] sm:$0xff]
    %v113 = vld [vmem:[%s3 + $0x80] sm:$0xf]
    %v114 = vld [vmem:[%s3 + $0x84] sm:$0xff]
    %v115 = vld [vmem:[%s3 + $0x8c] sm:$0xf]
    %v116 = vld [vmem:[%s3 + $0x90] sm:$0xff]
    %v117 = vld [vmem:[%s3 + $0x98] sm:$0xf]
    %v118 = vld [vmem:[%s3 + $0x9c] sm:$0xff]
    %v119 = vld [vmem:[%s3 + $0xa4] sm:$0xf]
    %v120 = vld [vmem:[%s3 + $0xa8] sm:$0xff]
    %v121 = vld [vmem:[%s3 + $0xb0] sm:$0xf]
    %v122 = vld [vmem:[%s3 + $0xb4] sm:$0xff]
    %v123 = vld [vmem:[%s3 + $0xbc] sm:$0xf]
    %v124 = vld [vmem:[%s4] sm:$0x7]
    %v126 = vlaneseq
    %v127 = vshrl.u32 %v126, 7
    %v128 = vsub.s32 0, %v127
    %v129 = vrot.slane %v124, %v128
    %v130 = vlaneseq
    %v131 = vshrl.u32 %v130, 7
    %v132 = vsub.s32 1, %v131
    %v133 = vrot.slane %v124, %v132
    %v134 = vlaneseq
    %v135 = vshrl.u32 %v134, 7
    %v136 = vsub.s32 2, %v135
    %v137 = vrot.slane %v124, %v136
    %v173 = vunpack.c.l.b16 %v92
    %v174 = vunpack.c.h.b16 %v92
    %v175 = vunpack.c.l.b16 %v93
    %v176 = vunpack.c.l.b16 %v94
    %v177 = vunpack.c.h.b16 %v94
    %v178 = vunpack.c.l.b16 %v95
    %v179 = vunpack.c.l.b16 %v96
    %v180 = vunpack.c.h.b16 %v96
    %v181 = vunpack.c.l.b16 %v97
    %v182 = vunpack.c.l.b16 %v98
    %v183 = vunpack.c.h.b16 %v98
    %v184 = vunpack.c.l.b16 %v99
    %v185 = vunpack.c.l.b16 %v100
    %v186 = vunpack.c.h.b16 %v100
    %v187 = vunpack.c.l.b16 %v101
    %v188 = vunpack.c.l.b16 %v102
    %v189 = vunpack.c.h.b16 %v102
    %v190 = vunpack.c.l.b16 %v103
    %v191 = vunpack.c.l.b16 %v104
    %v192 = vunpack.c.h.b16 %v104
    %v193 = vunpack.c.l.b16 %v105
    %v194 = vunpack.c.l.b16 %v106
    %v195 = vunpack.c.h.b16 %v106
    %v196 = vunpack.c.l.b16 %v107
    %v197 = vunpack.c.l.b16 %v108
    %v198 = vunpack.c.h.b16 %v108
    %v199 = vunpack.c.l.b16 %v109
    %v200 = vunpack.c.l.b16 %v110
    %v201 = vunpack.c.h.b16 %v110
    %v202 = vunpack.c.l.b16 %v111
    %v203 = vunpack.c.l.b16 %v112
    %v204 = vunpack.c.h.b16 %v112
    %v205 = vunpack.c.l.b16 %v113
    %v206 = vunpack.c.l.b16 %v114
    %v207 = vunpack.c.h.b16 %v114
    %v208 = vunpack.c.l.b16 %v115
    %v209 = vunpack.c.l.b16 %v116
    %v210 = vunpack.c.h.b16 %v116
    %v211 = vunpack.c.l.b16 %v117
    %v212 = vunpack.c.l.b16 %v118
    %v213 = vunpack.c.h.b16 %v118
    %v214 = vunpack.c.l.b16 %v119
    %v215 = vunpack.c.l.b16 %v120
    %v216 = vunpack.c.h.b16 %v120
    %v217 = vunpack.c.l.b16 %v121
    %v218 = vunpack.c.l.b16 %v122
    %v219 = vunpack.c.h.b16 %v122
    %v220 = vunpack.c.l.b16 %v123
    %v221 = vpack.c.b16 %v176, %v173
    %v222 = vpack.c.b16 %v177, %v174
    %v223 = vpack.c.b16 %v178, %v175
    %v224 = vpack.c.b16 %v182, %v179
    %v225 = vpack.c.b16 %v183, %v180
    %v226 = vpack.c.b16 %v184, %v181
    %v227 = vpack.c.b16 %v188, %v185
    %v228 = vpack.c.b16 %v189, %v186
    %v229 = vpack.c.b16 %v190, %v187
    %v230 = vpack.c.b16 %v194, %v191
    %v231 = vpack.c.b16 %v195, %v192
    %v232 = vpack.c.b16 %v196, %v193
    %v233 = vpack.c.b16 %v200, %v197
    %v234 = vpack.c.b16 %v201, %v198
    %v235 = vpack.c.b16 %v202, %v199
    %v236 = vpack.c.b16 %v206, %v203
    %v237 = vpack.c.b16 %v207, %v204
    %v238 = vpack.c.b16 %v208, %v205
    %v239 = vpack.c.b16 %v212, %v209
    %v240 = vpack.c.b16 %v213, %v210
    %v241 = vpack.c.b16 %v214, %v211
    %v242 = vpack.c.b16 %v218, %v215
    %v243 = vpack.c.b16 %v219, %v216
    %v244 = vpack.c.b16 %v220, %v217
    %269 = vmatprep.subr.bf16.mxu0 %v243
    %270 = vmatpush1.bf16.msra.mxu0 %v242
    %271 = vmatprep.subr.bf16.mxu0 %v240
    %272 = vmatpush1.bf16.msra.mxu0 %v239
    %273 = vmatprep.subr.bf16.mxu0 %v237
    %274 = vmatpush1.bf16.msra.mxu0 %v236
    %275 = vmatprep.subr.bf16.mxu0 %v234
    %276 = vmatpush1.bf16.msra.mxu0 %v233
    %277 = vmatprep.subr.bf16.mxu0 %v231
    %278 = vmatpush1.bf16.msra.mxu0 %v230
    %279 = vmatprep.subr.bf16.mxu0 %v228
    %280 = vmatpush1.bf16.msra.mxu0 %v227
    %281 = vmatprep.subr.bf16.mxu0 %v225
    %282 = vmatpush1.bf16.msra.mxu0 %v224
    %283 = vmatprep.subr.bf16.mxu0 %v222
    %284 = vmatpush1.bf16.msra.mxu0 %v221
    %285 = vmatprep.subr.bf16.mxu0 0
    %286 = vmatpush2.bf16.msra.mxu0 0
    %287 = vmatprep.subr.bf16.mxu0 0
    %288 = vmatpush2.bf16.msra.mxu0 0
    %289 = vmatprep.subr.bf16.mxu0 0
    %290 = vmatpush2.bf16.msra.mxu0 0
    %291 = vmatprep.subr.bf16.mxu0 0
    %292 = vmatpush2.bf16.msra.mxu0 0
    %293 = vmatprep.subr.bf16.mxu0 0
    %294 = vmatpush2.bf16.msra.mxu0 0
    %295 = vmatprep.subr.bf16.mxu0 0
    %296 = vmatpush2.bf16.msra.mxu0 0
    %297 = vmatprep.subr.bf16.mxu0 0
    %298 = vmatpush2.bf16.msra.mxu0 0
    %299 = vmatprep.subr.bf16.mxu0 0
    %300 = vmatpush2.bf16.msra.mxu0 0
    %301 = vmatprep.mubr.bf16.mxu0 0
    %302 = vmatmul.mubr.bf16.gmra.mxu0 %v91
    %v303 = vpop.f32.mrf.mxu0
    %v304 = vadd.f32 %v129, %v303
    %v305 = vpop.f32.mrf.mxu0
    %v306 = vadd.f32 %v133, %v305
    %v307 = vpop.f32.mrf.mxu0
    %v308 = vadd.f32 %v129, %v307
    %v309 = vpop.f32.mrf.mxu0
    %v310 = vadd.f32 %v133, %v309
    %311 = vdwg.mxu0
    %312 = vmatprep.subr.bf16.mxu0 0
    %313 = vmatpush1.bf16.msra.mxu0 %v244
    %314 = vmatprep.subr.bf16.mxu0 0
    %315 = vmatpush1.bf16.msra.mxu0 %v241
    %316 = vmatprep.subr.bf16.mxu0 0
    %317 = vmatpush1.bf16.msra.mxu0 %v238
    %318 = vmatprep.subr.bf16.mxu0 0
    %319 = vmatpush1.bf16.msra.mxu0 %v235
    %320 = vmatprep.subr.bf16.mxu0 0
    %321 = vmatpush1.bf16.msra.mxu0 %v232
    %322 = vmatprep.subr.bf16.mxu0 0
    %323 = vmatpush1.bf16.msra.mxu0 %v229
    %324 = vmatprep.subr.bf16.mxu0 0
    %325 = vmatpush1.bf16.msra.mxu0 %v226
    %326 = vmatprep.subr.bf16.mxu0 0
    %327 = vmatpush1.bf16.msra.mxu0 %v223
    %328 = vmatprep.subr.bf16.mxu0 0
    %329 = vmatpush2.bf16.msra.mxu0 0
    %330 = vmatprep.subr.bf16.mxu0 0
    %331 = vmatpush2.bf16.msra.mxu0 0
    %332 = vmatprep.subr.bf16.mxu0 0
    %333 = vmatpush2.bf16.msra.mxu0 0
    %334 = vmatprep.subr.bf16.mxu0 0
    %335 = vmatpush2.bf16.msra.mxu0 0
    %336 = vmatprep.subr.bf16.mxu0 0
    %337 = vmatpush2.bf16.msra.mxu0 0
    %338 = vmatprep.subr.bf16.mxu0 0
    %339 = vmatpush2.bf16.msra.mxu0 0
    %340 = vmatprep.subr.bf16.mxu0 0
    %341 = vmatpush2.bf16.msra.mxu0 0
    %342 = vmatprep.subr.bf16.mxu0 0
    %343 = vmatpush2.bf16.msra.mxu0 0
    %344 = vmatprep.mubr.bf16.mxu0 0
    %345 = vmatmul.mubr.bf16.gmra.mxu0 %v91
    %v346 = vpop.f32.mrf.mxu0
    %v347 = vadd.f32 %v137, %v346
    %v348 = vpop.f32.mrf.mxu0
    %v349 = vpop.f32.mrf.mxu0
    %v350 = vadd.f32 %v137, %v349
    %v351 = vpop.f32.mrf.mxu0
    %352 = vdwg.mxu0
    %353 = vst [vmem:[#allocation2] sm:$0xff] %v304
    %354 = vst [vmem:[#allocation2 + $0x8] sm:$0xff] %v306
    %vm355 = vcmask 15360
    %356 = vst.msk [vmem:[#allocation2 + $0x10] sm:$0xff] %vm355, %v347
    %357 = vst [vmem:[#allocation2 + $0x18] sm:$0xff] %v308
    %358 = vst [vmem:[#allocation2 + $0x20] sm:$0xff] %v310
    %359 = vst.msk [vmem:[#allocation2 + $0x28] sm:$0xff] %vm355, %v350
    // Predicated region
    $region22: #{tpu_custom_call.1} parent=1 // pred_check
      _
    $region23: #{tpu_custom_call.1} parent=1 // pred_check_branch
      %361 = sbr.rel (0) target = $region25
    $region24: #{tpu_custom_call.1} parent=1 // pred_region
      %s363 = ssub.s32 768, 768
      %364 = vsyncadd [#allocation3], %s363
      %s365 = sshll.u32 [#allocation2], 4
      %s366 = int_to_ptr.vmem [resolvable:$true] %s365
      %371 = dma.vmem_to_hbm [thread:$0]  %s366, 768, %s5, [#allocation3], 384, 384, 24
    $region25: #{tpu_custom_call.1} parent=1 // pred_fallthru
      _
    // Predicated region
    $region26: #{tpu_custom_call.1} parent=1 // pred_check
      _
    $region27: #{tpu_custom_call.1} parent=1 // pred_check_branch
      %373 = sbr.rel (0) target = $region29
    $region28: #{tpu_custom_call.1} parent=1 // pred_region
      %374 = dma.done [#allocation3], 768
    $region29: #{tpu_custom_call.1} parent=1 // pred_fallthru
      _
    %375 = vsyncpa [#allocation3], 1

</llo_original>
